<compile_context>
chip_gen: v6e
topology: v6e:2x2x1
jax: 0.10.0
libtpu: 0.0.40
codegen_flags: <defaults>
</compile_context>

<pallas_src>
import functools

import jax
import jax.numpy as jnp
from jax import lax
from jax.experimental import pallas as pl
from jax.experimental.pallas import tpu as pltpu

_DEFAULT_STRIP_ROWS = 256          # reviewer: 256-512 row strips bound the live set
_ROLL_OK_CACHE = {}


# --------------------------------------------------------------------------- #
# Hardware / capability queries
# --------------------------------------------------------------------------- #

def _vmem_capacity_bytes():
    try:
        return int(getattr(pltpu.get_tpu_info(), "vmem_capacity_bytes", 64 << 20))
    except Exception:
        return 64 << 20            # v7x-safe default


def _roll_supported(rows, cols):
    """Probe (once per shape) that pltpu.roll lowers for (rows, cols) f32 tiles
    and has np.roll direction semantics; otherwise use the concatenate path."""
    key = (rows, cols)
    if key in _ROLL_OK_CACHE:
        return _ROLL_OK_CACHE[key]

    def probe(x_ref, o_ref):
        a = x_ref[...]
        row0 = a[0:1, :]
        o_ref[...] = (pltpu.roll(a, 1, 0)
                      + 2.0 * pltpu.roll(a, rows - 1, 0)
                      + 4.0 * pltpu.roll(a, 1, 1)
                      + 8.0 * pltpu.roll(a, cols - 1, 1)
                      + 16.0 * pltpu.roll(row0, 1, 1)
                      + 32.0 * pltpu.roll(row0, cols - 1, 1))

    ok = False
    try:
        with jax.ensure_compile_time_eval():
            x = jnp.arange(rows * cols, dtype=jnp.float32).reshape(rows, cols)
            got = pl.pallas_call(
                probe, out_shape=jax.ShapeDtypeStruct((rows, cols), jnp.float32))(x)
            want = (jnp.roll(x, 1, 0) + 2.0 * jnp.roll(x, rows - 1, 0)
                    + 4.0 * jnp.roll(x, 1, 1) + 8.0 * jnp.roll(x, cols - 1, 1)
                    + 16.0 * jnp.roll(x[0:1, :], 1, 1)
                    + 32.0 * jnp.roll(x[0:1, :], cols - 1, 1))
            ok = bool(jnp.allclose(got, want))
    except Exception:
        ok = False
    _ROLL_OK_CACHE[key] = ok
    return ok


# --------------------------------------------------------------------------- #
# SAME-padded unit shifts (roll + mask preferred; concatenate fallback)
# --------------------------------------------------------------------------- #

def _cols_left(a, use_roll):
    # out[:, j] = a[:, j-1] for j > 0, out[:, 0] = 0.
    if use_roll:
        cols = lax.broadcasted_iota(jnp.int32, a.shape, 1)
        return jnp.where(cols == 0, jnp.float32(0.0), pltpu.roll(a, 1, 1))
    return jnp.concatenate([jnp.zeros((a.shape[0], 1), a.dtype), a[:, :-1]], axis=1)


def _cols_right(a, use_roll):
    # out[:, j] = a[:, j+1] for j < W-1, out[:, W-1] = 0.
    if use_roll:
        w = a.shape[1]
        cols = lax.broadcasted_iota(jnp.int32, a.shape, 1)
        return jnp.where(cols == w - 1, jnp.float32(0.0), pltpu.roll(a, w - 1, 1))
    return jnp.concatenate([a[:, 1:], jnp.zeros((a.shape[0], 1), a.dtype)], axis=1)


def _rows_up(a, top_row, use_roll):
    # out[i] = a[i-1] for i > 0, out[0] = top_row  (top_row: (1, W)).
    if use_roll:
        rows = lax.broadcasted_iota(jnp.int32, a.shape, 0)
        return jnp.where(rows == 0, top_row, pltpu.roll(a, 1, 0))
    return jnp.concatenate([top_row, a[:-1, :]], axis=0)


def _rows_down(a, bottom_row, use_roll):
    # out[i] = a[i+1] for i < n-1, out[n-1] = bottom_row  (bottom_row: (1, W)).
    if use_roll:
        n = a.shape[0]
        rows = lax.broadcasted_iota(jnp.int32, a.shape, 0)
        return jnp.where(rows == n - 1, bottom_row, pltpu.roll(a, n - 1, 0))
    return jnp.concatenate([a[1:, :], bottom_row], axis=0)


def _halo_rows(ref, r0, r1, h):
    """Rows ref[r0-1] and ref[r1] as (1, W) f32, zero-filled past the image edge."""
    above = ref[pl.ds(jnp.maximum(r0 - 1, 0), 1), :].astype(jnp.float32)
    below = ref[pl.ds(jnp.minimum(r1, h - 1), 1), :].astype(jnp.float32)
    above = jnp.where(r0 > 0, above, jnp.float32(0.0))
    below = jnp.where(r1 < h, below, jnp.float32(0.0))
    return above, below


def _smooth_and_diff(u, use_roll):
    """Horizontal [1,2,1] smoothing and [-1,0,1] difference with zero padding."""
    l = _cols_left(u, use_roll)
    r = _cols_right(u, use_roll)
    return (l + r) + (u + u), r - l


# --------------------------------------------------------------------------- #
# Strip-mined Sobel-product + TV partial sums for one (H, W) image
# --------------------------------------------------------------------------- #

def _sobel_tv_partial(x_ref, ev_ref, *, strip, use_roll):
    """x_ref: (H, W) ref (any float dtype); ev_ref: (H, W) f32 ref holding
    event.sum(dim=1).  `strip` must divide H.  Returns (sobel_sum, tv_sum)."""
    h, w = ev_ref.shape
    nstrips = h // strip
    eps = jnp.float32(1e-5)

    def grads_sq(u_c, u_a, u_b):
        s_c, d_c = _smooth_and_diff(u_c, use_roll)
        s_a, d_a = _smooth_and_diff(u_a, use_roll)
        s_b, d_b = _smooth_and_diff(u_b, use_roll)
        gx = _rows_down(s_c, s_b, use_roll) - _rows_up(s_c, s_a, use_roll)
        gy = (_rows_up(d_c, d_a, use_roll) + _rows_down(d_c, d_b, use_roll)) + (d_c + d_c)
        return gx * gx + gy * gy

    def body(s, carry):
        sob_acc, tv_acc = carry
        r0 = pl.multiple_of(s * strip, strip)
        r1 = r0 + strip

        xs = x_ref[pl.ds(r0, strip), :].astype(jnp.float32)
        es = ev_ref[pl.ds(r0, strip), :]
        x_a, x_b = _halo_rows(x_ref, r0, r1, h)
        e_a, e_b = _halo_rows(ev_ref, r0, r1, h)

        # One EUP sqrt pass: sqrt(A+eps)*sqrt(B+eps) == sqrt((A+eps)*(B+eps)).
        sob = jnp.sqrt((grads_sq(es, e_a, e_b) + eps) * (grads_sq(xs, x_a, x_b) + eps))

        # TV terms, full-tile masked (no misaligned slices).
        rows = lax.broadcasted_iota(jnp.int32, (strip, w), 0) + r0
        cols = lax.broadcasted_iota(jnp.int32, (strip, w), 1)
        dv = jnp.where(rows < h - 1, _rows_down(xs, x_b, use_roll) - xs, jnp.float32(0.0))
        dh = jnp.where(cols < w - 1, _cols_right(xs, use_roll) - xs, jnp.float32(0.0))

        return (sob_acc + jnp.sum(sob),
                tv_acc + jnp.sum(dv * dv) + jnp.sum(dh * dh))

    return lax.fori_loop(0, nstrips, body,
                         (jnp.float32(0.0), jnp.float32(0.0)),
                         unroll=nstrips <= 4)


# --------------------------------------------------------------------------- #
# Kernels
# --------------------------------------------------------------------------- #

def _total_loss_folded_kernel(x_ref, ev_ref, out_ref, ev_sum_ref, *,
                              weight, inv_denom, strip, use_roll):
    """One batch element per grid step; E reduction folded into the block."""
    n_ev = ev_ref.shape[0]
    acc = ev_ref[0].astype(jnp.float32)
    for k in range(1, n_ev):                      # E is small & static
        acc = acc + ev_ref[k].astype(jnp.float32)
    ev_sum_ref[...] = acc

    sob_sum, tv_sum = _sobel_tv_partial(x_ref, ev_sum_ref, strip=strip, use_roll=use_roll)
    partial = (jnp.float32(weight) * sob_sum + tv_sum) * jnp.float32(inv_denom)
    out_ref[...] = jnp.broadcast_to(partial, out_ref.shape)      # lane-dense store


def _total_loss_gridded_kernel(x_ref, ev_ref, out_ref, ev_sum_ref, *,
                               weight, inv_denom, strip, use_roll):
    """Fallback for very large E*H*W: one event slice streamed per grid step."""
    e = pl.program_id(1)

    @pl.when(e == 0)
    def _():
        ev_sum_ref[...] = ev_ref[...].astype(jnp.float32)        # assign, no zero+add

    @pl.when(e > 0)
    def _():
        ev_sum_ref[...] += ev_ref[...].astype(jnp.float32)

    @pl.when(e == pl.num_programs(1) - 1)
    def _():
        sob_sum, tv_sum = _sobel_tv_partial(x_ref, ev_sum_ref,
                                            strip=strip, use_roll=use_roll)
        partial = (jnp.float32(weight) * sob_sum + tv_sum) * jnp.float32(inv_denom)
        out_ref[...] = jnp.broadcast_to(partial, out_ref.shape)


# --------------------------------------------------------------------------- #
# Wrapper
# --------------------------------------------------------------------------- #

def _pick_strip(h, requested=None, max_rows=_DEFAULT_STRIP_ROWS):
    if requested is not None and requested > 0 and h % requested == 0:
        return int(requested)
    if h <= max_rows:
        return h
    s = (max_rows // 8) * 8
    while s >= 8:
        if h % s == 0:
            return s
        s -= 8
    return h              # no 8-aligned divisor; single strip


def total_loss_pallas(x, event, weight=-1.0, *, strip_rows=None, force_path=None):
    """x: (B, 1, H, W), event: (B, E, H, W) -> scalar float32 total loss."""
    B, C, H, W = x.shape
    assert C == 1, "sobel_loss conv expects single-channel x"
    Be, E, He, We = event.shape
    assert (Be, He, We) == (B, H, W)

    strip = _pick_strip(H, strip_rows)
    use_roll = _roll_supported(strip, W)

    # ---- VMEM budget (per generation) and path selection ----
    cap = _vmem_capacity_bytes()
    usable = max(min(cap - (8 << 20), (cap * 4) // 5), 32 << 20)   # keep pipeline headroom
    xbytes, ebytes = x.dtype.itemsize, event.dtype.itemsize
    temps = 16 * strip * W * 4 + 3 * H * W * 4                     # finalize live temporaries
    out_bytes = 2 * 8 * 128 * 4
    folded_ws = 2 * H * W * xbytes + 2 * E * H * W * ebytes + H * W * 4 + temps + out_bytes

    path = force_path or ("folded" if folded_ws <= usable else "gridded")
    params = dict(weight=float(weight), inv_denom=1.0 / float(B * C * H * W),
                  strip=strip, use_roll=use_roll)

    # TODO(synk): for very small H*W, coalesce several batch elements per grid
    # step (flattened (TILE_B*H, W) tiles) to reach the >=512 KiB DMA sweet spot.
    # TODO(synk): for images where even one (1+E)*H*W block exceeds VMEM, add
    # H-halo DMA tiling (pl.Element row offsets) and mark that axis "parallel"
    # so B==1 still uses both v7x TensorCores.

    if path == "folded":
        grid_spec = pltpu.PrefetchScalarGridSpec(
            num_scalar_prefetch=0,
            grid=(B,),
            in_specs=[
                pl.BlockSpec((None, None, H, W), lambda b: (b, 0, 0, 0)),   # x
                pl.BlockSpec((None, E, H, W), lambda b: (b, 0, 0, 0)),      # event (E folded)
            ],
            out_specs=pl.BlockSpec((None, 8, 128), lambda b: (b, 0, 0)),
            scratch_shapes=[pltpu.VMEM((H, W), jnp.float32)],               # event.sum(dim=1)
        )
        kernel = functools.partial(_total_loss_folded_kernel, **params)
        semantics = ("parallel",)
    else:
        ev_spec = pl.BlockSpec((None, None, H, W), lambda b, e: (b, e, 0, 0))
        gridded_ws = (2 * H * W * xbytes + 3 * H * W * ebytes + H * W * 4
                      + temps + out_bytes)
        if E >= 3 and gridded_ws <= usable:
            try:   # deeper buffering: accumulate phase is ~1 VPU add per loaded element
                ev_spec = pl.BlockSpec((None, None, H, W), lambda b, e: (b, e, 0, 0),
                                       pipeline_mode=pl.Buffered(3))
            except TypeError:
                pass
        grid_spec = pltpu.PrefetchScalarGridSpec(
            num_scalar_prefetch=0,
            grid=(B, E),                                                    # E last: reduction
            in_specs=[
                pl.BlockSpec((None, None, H, W), lambda b, e: (b, 0, 0, 0)),  # x (resident)
                ev_spec,
            ],
            out_specs=pl.BlockSpec((None, 8, 128), lambda b, e: (b, 0, 0)),
            scratch_shapes=[pltpu.VMEM((H, W), jnp.float32)],
        )
        kernel = functools.partial(_total_loss_gridded_kernel, **params)
        semantics = ("parallel", "arbitrary")

    partials = pl.pallas_call(
        kernel,
        out_shape=jax.ShapeDtypeStruct((B, 8, 128), jnp.float32),
        grid_spec=grid_spec,
        compiler_params=pltpu.CompilerParams(
            dimension_semantics=semantics,
            vmem_limit_bytes=int(usable)),
    )(x, event)

    return jnp.sum(partials[:, 0, 0])


# --------------------------------------------------------------------------- #
# Pure-JAX reference (mirrors the PyTorch module)
# --------------------------------------------------------------------------- #

SOBEL_X = ((-1.0, -2.0, -1.0), (0.0, 0.0, 0.0), (1.0, 2.0, 1.0))
SOBEL_Y = ((-1.0, 0.0, 1.0), (-2.0, 0.0, 2.0), (-1.0, 0.0, 1.0))


def _total_loss_ref(x, event, weight=-1.0):
    B, C, H, W = x.shape
    kx = jnp.asarray(SOBEL_X, jnp.float32)[None, None]
    ky = jnp.asarray(SOBEL_Y, jnp.float32)[None, None]
    ev = jnp.sum(event, axis=1, keepdims=True)

    def conv(img, k):
        return lax.conv_general_dilated(img, k, (1, 1), [(1, 1), (1, 1)],
                                        dimension_numbers=("NCHW", "OIHW", "NCHW"))

    sob_ev = jnp.sqrt(conv(ev, kx) ** 2 + conv(ev, ky) ** 2 + 1e-5)
    sob_x = jnp.sqrt(conv(x, kx) ** 2 + conv(x, ky) ** 2 + 1e-5)
    sobel_l = jnp.sum(sob_ev * sob_x) / (B * C * H * W)
    tv_l = (jnp.sum((x[:, :, 1:, :] - x[:, :, :-1, :]) ** 2)
            + jnp.sum((x[:, :, :, 1:] - x[:, :, :, :-1]) ** 2)) / (B * C * H * W)
    return weight * sobel_l + tv_l


if __name__ == "__main__":
    key = jax.random.PRNGKey(0)
    k1, k2 = jax.random.split(key)
    B, E, H, W = 2, 4, 16, 16
    x = jax.random.normal(k1, (B, 1, H, W), dtype=jnp.float32)
    event = jax.random.normal(k2, (B, E, H, W), dtype=jnp.float32)

    ref = _total_loss_ref(x, event, weight=-1.0)

    # Primary folded-E path (single strip since H <= default strip rows).
    loss = total_loss_pallas(x, event, weight=-1.0)
    jax.block_until_ready(loss)
    assert jnp.allclose(loss, ref, rtol=1e-4, atol=1e-4), (loss, ref)

    # Strip-mined finalize (two 8-row strips) — exercises the halo logic.
    loss_s = total_loss_pallas(x, event, weight=-1.0, strip_rows=8)
    jax.block_until_ready(loss_s)
    assert jnp.allclose(loss_s, ref, rtol=1e-4, atol=1e-4), (loss_s, ref)

    # Gridded-E fallback path (used when a folded block would not fit VMEM).
    loss_g = total_loss_pallas(x, event, weight=-1.0, strip_rows=8,
                               force_path="gridded")
    jax.block_until_ready(loss_g)
    assert jnp.allclose(loss_g, ref, rtol=1e-4, atol=1e-4), (loss_g, ref)

    print("KERNEL_OK")
</pallas_src>

<mosaic_0001>
module attributes {stable_mosaic.version = 11 : i64} {
  func.func @probe(%arg0: memref<16x16xf32, #tpu.memory_space<vmem>>, %arg1: memref<16x16xf32, #tpu.memory_space<vmem>>) attributes {dimension_semantics = [], scalar_prefetch = 0 : i64, scratch_operands = 0 : i64, tpu.core_type = #tpu.core_type<tc>} {
    %c0 = arith.constant 0 : index
    %c0_0 = arith.constant 0 : index
    %0 = vector.load %arg0[%c0, %c0_0] : memref<16x16xf32, #tpu.memory_space<vmem>>, vector<16x16xf32>
    %1 = vector.extract_strided_slice %0 {offsets = [0, 0], sizes = [1, 16], strides = [1, 1]} : vector<16x16xf32> to vector<1x16xf32>
    %c1_i32 = arith.constant 1 : i32
    %2 = tpu.dynamic_rotate %0 by %c1_i32 dim 0 : vector<16x16xf32>, i32 -> vector<16x16xf32>
    %c15_i32 = arith.constant 15 : i32
    %3 = tpu.dynamic_rotate %0 by %c15_i32 dim 0 : vector<16x16xf32>, i32 -> vector<16x16xf32>
    %cst = arith.constant 2.000000e+00 : f32
    %4 = vector.broadcast %cst : f32 to vector<16x16xf32>
    %5 = arith.mulf %4, %3 : vector<16x16xf32>
    %6 = arith.addf %2, %5 : vector<16x16xf32>
    %c1_i32_1 = arith.constant 1 : i32
    %7 = tpu.dynamic_rotate %0 by %c1_i32_1 dim 1 : vector<16x16xf32>, i32 -> vector<16x16xf32>
    %cst_2 = arith.constant 4.000000e+00 : f32
    %8 = vector.broadcast %cst_2 : f32 to vector<16x16xf32>
    %9 = arith.mulf %8, %7 : vector<16x16xf32>
    %10 = arith.addf %6, %9 : vector<16x16xf32>
    %c15_i32_3 = arith.constant 15 : i32
    %11 = tpu.dynamic_rotate %0 by %c15_i32_3 dim 1 : vector<16x16xf32>, i32 -> vector<16x16xf32>
    %cst_4 = arith.constant 8.000000e+00 : f32
    %12 = vector.broadcast %cst_4 : f32 to vector<16x16xf32>
    %13 = arith.mulf %12, %11 : vector<16x16xf32>
    %14 = arith.addf %10, %13 : vector<16x16xf32>
    %c1_i32_5 = arith.constant 1 : i32
    %15 = tpu.dynamic_rotate %1 by %c1_i32_5 dim 1 : vector<1x16xf32>, i32 -> vector<1x16xf32>
    %cst_6 = arith.constant 1.600000e+01 : f32
    %16 = vector.broadcast %cst_6 : f32 to vector<1x16xf32>
    %17 = arith.mulf %16, %15 : vector<1x16xf32>
    %18 = vector.broadcast %17 : vector<1x16xf32> to vector<16x16xf32>
    %19 = arith.addf %14, %18 : vector<16x16xf32>
    %c15_i32_7 = arith.constant 15 : i32
    %20 = tpu.dynamic_rotate %1 by %c15_i32_7 dim 1 : vector<1x16xf32>, i32 -> vector<1x16xf32>
    %cst_8 = arith.constant 3.200000e+01 : f32
    %21 = vector.broadcast %cst_8 : f32 to vector<1x16xf32>
    %22 = arith.mulf %21, %20 : vector<1x16xf32>
    %23 = vector.broadcast %22 : vector<1x16xf32> to vector<16x16xf32>
    %24 = arith.addf %19, %23 : vector<16x16xf32>
    %c0_9 = arith.constant 0 : index
    %c0_10 = arith.constant 0 : index
    %25 = vector.load %arg1[%c0_9, %c0_10] : memref<16x16xf32, #tpu.memory_space<vmem>>, vector<16x16xf32>
    tpu.vector_store %arg1[%c0_9, %c0_10], %24 {strides = array<i32>} : memref<16x16xf32, #tpu.memory_space<vmem>>, vector<16x16xf32>,
    return
  }
}

module attributes {stable_mosaic.version = 11 : i64} {
  func.func @_total_loss_folded_kernel(%arg0: i32, %arg1: memref<1x1x16x16xf32, #tpu.memory_space<vmem>>, %arg2: memref<1x4x16x16xf32, #tpu.memory_space<vmem>>, %arg3: memref<1x8x128xf32, #tpu.memory_space<vmem>>, %arg4: memref<16x16xf32, #tpu.memory_space<vmem>>) attributes {dimension_semantics = [#tpu.dimension_semantics<parallel>], iteration_bounds = array<i64: 2>, scalar_prefetch = 0 : i64, scratch_operands = 1 : i64, tpu.core_type = #tpu.core_type<tc>, window_params = [{transform_indices = @transform_0, window_bounds = array<i64: 1, 1, 16, 16>}, {transform_indices = @transform_1, window_bounds = array<i64: 1, 4, 16, 16>}, {transform_indices = @transform_2, window_bounds = array<i64: 1, 8, 128>}]} {
    %c0 = arith.constant 0 : index
    %c0_0 = arith.constant 0 : index
    %c0_1 = arith.constant 0 : index
    %c0_2 = arith.constant 0 : index
    %0 = vector.load %arg2[%c0, %c0_0, %c0_1, %c0_2] : memref<1x4x16x16xf32, #tpu.memory_space<vmem>>, vector<1x1x16x16xf32>
    %1 = vector.shape_cast %0 : vector<1x1x16x16xf32> to vector<16x16xf32>
    %c0_3 = arith.constant 0 : index
    %c1 = arith.constant 1 : index
    %c0_4 = arith.constant 0 : index
    %c0_5 = arith.constant 0 : index
    %2 = vector.load %arg2[%c0_3, %c1, %c0_4, %c0_5] : memref<1x4x16x16xf32, #tpu.memory_space<vmem>>, vector<1x1x16x16xf32>
    %3 = vector.shape_cast %2 : vector<1x1x16x16xf32> to vector<16x16xf32>
    %4 = arith.addf %1, %3 : vector<16x16xf32>
    %c0_6 = arith.constant 0 : index
    %c2 = arith.constant 2 : index
    %c0_7 = arith.constant 0 : index
    %c0_8 = arith.constant 0 : index
    %5 = vector.load %arg2[%c0_6, %c2, %c0_7, %c0_8] : memref<1x4x16x16xf32, #tpu.memory_space<vmem>>, vector<1x1x16x16xf32>
    %6 = vector.shape_cast %5 : vector<1x1x16x16xf32> to vector<16x16xf32>
    %7 = arith.addf %4, %6 : vector<16x16xf32>
    %c0_9 = arith.constant 0 : index
    %c3 = arith.constant 3 : index
    %c0_10 = arith.constant 0 : index
    %c0_11 = arith.constant 0 : index
    %8 = vector.load %arg2[%c0_9, %c3, %c0_10, %c0_11] : memref<1x4x16x16xf32, #tpu.memory_space<vmem>>, vector<1x1x16x16xf32>
    %9 = vector.shape_cast %8 : vector<1x1x16x16xf32> to vector<16x16xf32>
    %10 = arith.addf %7, %9 : vector<16x16xf32>
    %c0_12 = arith.constant 0 : index
    %c0_13 = arith.constant 0 : index
    %11 = vector.load %arg4[%c0_12, %c0_13] : memref<16x16xf32, #tpu.memory_space<vmem>>, vector<16x16xf32>
    tpu.vector_store %arg4[%c0_12, %c0_13], %10 {strides = array<i32>} : memref<16x16xf32, #tpu.memory_space<vmem>>, vector<16x16xf32>,
    %cst = arith.constant 9.99999974E-6 : f32
    %cst_14 = arith.constant 0.000000e+00 : f32
    %cst_15 = arith.constant 0.000000e+00 : f32
    %c0_i32 = arith.constant 0 : i32
    %c16_i32 = arith.constant 16 : i32
    %12 = arith.muli %c0_i32, %c16_i32 : i32
    %13 = tpu.assume_multiple %12, 16 : i32
    %c16_i32_16 = arith.constant 16 : i32
    %14 = arith.addi %13, %c16_i32_16 : i32
    %c0_17 = arith.constant 0 : index
    %c0_18 = arith.constant 0 : index
    %15 = arith.index_cast %13 : i32 to index
    %c0_19 = arith.constant 0 : index
    %16 = vector.load %arg1[%c0_17, %c0_18, %15, %c0_19] : memref<1x1x16x16xf32, #tpu.memory_space<vmem>>, vector<1x1x16x16xf32>
    %17 = vector.shape_cast %16 : vector<1x1x16x16xf32> to vector<16x16xf32>
    %18 = arith.index_cast %13 : i32 to index
    %c0_20 = arith.constant 0 : index
    %19 = vector.load %arg4[%18, %c0_20] : memref<16x16xf32, #tpu.memory_space<vmem>>, vector<16x16xf32>
    %c1_i32 = arith.constant 1 : i32
    %20 = arith.subi %13, %c1_i32 : i32
    %c0_i32_21 = arith.constant 0 : i32
    %21 = arith.maxsi %20, %c0_i32_21 : i32
    %c0_22 = arith.constant 0 : index
    %c0_23 = arith.constant 0 : index
    %22 = arith.index_cast %21 : i32 to index
    %c0_24 = arith.constant 0 : index
    %23 = vector.load %arg1[%c0_22, %c0_23, %22, %c0_24] : memref<1x1x16x16xf32, #tpu.memory_space<vmem>>, vector<1x1x1x16xf32>
    %24 = vector.shape_cast %23 : vector<1x1x1x16xf32> to vector<1x16xf32>
    %c15_i32 = arith.constant 15 : i32
    %25 = arith.minsi %14, %c15_i32 : i32
    %c0_25 = arith.constant 0 : index
    %c0_26 = arith.constant 0 : index
    %26 = arith.index_cast %25 : i32 to index
    %c0_27 = arith.constant 0 : index
    %27 = vector.load %arg1[%c0_25, %c0_26, %26, %c0_27] : memref<1x1x16x16xf32, #tpu.memory_space<vmem>>, vector<1x1x1x16xf32>
    %28 = vector.shape_cast %27 : vector<1x1x1x16xf32> to vector<1x16xf32>
    %c0_i32_28 = arith.constant 0 : i32
    %29 = arith.cmpi sgt, %13, %c0_i32_28 : i32
    %cst_29 = arith.constant 0.000000e+00 : f32
    %30 = vector.broadcast %cst_29 : f32 to vector<1x16xf32>
    %31 = arith.select %29, %24, %30 : vector<1x16xf32>
    %c16_i32_30 = arith.constant 16 : i32
    %32 = arith.cmpi slt, %14, %c16_i32_30 : i32
    %cst_31 = arith.constant 0.000000e+00 : f32
    %33 = vector.broadcast %cst_31 : f32 to vector<1x16xf32>
    %34 = arith.select %32, %28, %33 : vector<1x16xf32>
    %c1_i32_32 = arith.constant 1 : i32
    %35 = arith.subi %13, %c1_i32_32 : i32
    %c0_i32_33 = arith.constant 0 : i32
    %36 = arith.maxsi %35, %c0_i32_33 : i32
    %37 = arith.index_cast %36 : i32 to index
    %c0_34 = arith.constant 0 : index
    %38 = vector.load %arg4[%37, %c0_34] : memref<16x16xf32, #tpu.memory_space<vmem>>, vector<1x16xf32>
    %c15_i32_35 = arith.constant 15 : i32
    %39 = arith.minsi %14, %c15_i32_35 : i32
    %40 = arith.index_cast %39 : i32 to index
    %c0_36 = arith.constant 0 : index
    %41 = vector.load %arg4[%40, %c0_36] : memref<16x16xf32, #tpu.memory_space<vmem>>, vector<1x16xf32>
    %c0_i32_37 = arith.constant 0 : i32
    %42 = arith.cmpi sgt, %13, %c0_i32_37 : i32
    %cst_38 = arith.constant 0.000000e+00 : f32
    %43 = vector.broadcast %cst_38 : f32 to vector<1x16xf32>
    %44 = arith.select %42, %38, %43 : vector<1x16xf32>
    %c16_i32_39 = arith.constant 16 : i32
    %45 = arith.cmpi slt, %14, %c16_i32_39 : i32
    %cst_40 = arith.constant 0.000000e+00 : f32
    %46 = vector.broadcast %cst_40 : f32 to vector<1x16xf32>
    %47 = arith.select %45, %41, %46 : vector<1x16xf32>
    %cst_41 = arith.constant 0.000000e+00 : f32
    %48 = vector.broadcast %cst_41 : f32 to vector<16x1xf32>
    %49 = vector.extract_strided_slice %19 {offsets = [0, 0], sizes = [16, 15], strides = [1, 1]} : vector<16x16xf32> to vector<16x15xf32>
    %50 = tpu.concatenate %48, %49 in 1 : vector<16x1xf32>, vector<16x15xf32> -> vector<16x16xf32>
    %51 = vector.extract_strided_slice %19 {offsets = [0, 1], sizes = [16, 15], strides = [1, 1]} : vector<16x16xf32> to vector<16x15xf32>
    %cst_42 = arith.constant 0.000000e+00 : f32
    %52 = vector.broadcast %cst_42 : f32 to vector<16x1xf32>
    %53 = tpu.concatenate %51, %52 in 1 : vector<16x15xf32>, vector<16x1xf32> -> vector<16x16xf32>
    %54 = arith.addf %50, %53 : vector<16x16xf32>
    %55 = arith.addf %19, %19 : vector<16x16xf32>
    %56 = arith.addf %54, %55 : vector<16x16xf32>
    %57 = arith.subf %53, %50 : vector<16x16xf32>
    %cst_43 = arith.constant 0.000000e+00 : f32
    %58 = vector.broadcast %cst_43 : f32 to vector<1x1xf32>
    %59 = vector.extract_strided_slice %44 {offsets = [0, 0], sizes = [1, 15], strides = [1, 1]} : vector<1x16xf32> to vector<1x15xf32>
    %60 = tpu.concatenate %58, %59 in 1 : vector<1x1xf32>, vector<1x15xf32> -> vector<1x16xf32>
    %61 = vector.extract_strided_slice %44 {offsets = [0, 1], sizes = [1, 15], strides = [1, 1]} : vector<1x16xf32> to vector<1x15xf32>
    %cst_44 = arith.constant 0.000000e+00 : f32
    %62 = vector.broadcast %cst_44 : f32 to vector<1x1xf32>
    %63 = tpu.concatenate %61, %62 in 1 : vector<1x15xf32>, vector<1x1xf32> -> vector<1x16xf32>
    %64 = arith.addf %60, %63 : vector<1x16xf32>
    %65 = arith.addf %44, %44 : vector<1x16xf32>
    %66 = arith.addf %64, %65 : vector<1x16xf32>
    %67 = arith.subf %63, %60 : vector<1x16xf32>
    %cst_45 = arith.constant 0.000000e+00 : f32
    %68 = vector.broadcast %cst_45 : f32 to vector<1x1xf32>
    %69 = vector.extract_strided_slice %47 {offsets = [0, 0], sizes = [1, 15], strides = [1, 1]} : vector<1x16xf32> to vector<1x15xf32>
    %70 = tpu.concatenate %68, %69 in 1 : vector<1x1xf32>, vector<1x15xf32> -> vector<1x16xf32>
    %71 = vector.extract_strided_slice %47 {offsets = [0, 1], sizes = [1, 15], strides = [1, 1]} : vector<1x16xf32> to vector<1x15xf32>
    %cst_46 = arith.constant 0.000000e+00 : f32
    %72 = vector.broadcast %cst_46 : f32 to vector<1x1xf32>
    %73 = tpu.concatenate %71, %72 in 1 : vector<1x15xf32>, vector<1x1xf32> -> vector<1x16xf32>
    %74 = arith.addf %70, %73 : vector<1x16xf32>
    %75 = arith.addf %47, %47 : vector<1x16xf32>
    %76 = arith.addf %74, %75 : vector<1x16xf32>
    %77 = arith.subf %73, %70 : vector<1x16xf32>
    %78 = vector.extract_strided_slice %56 {offsets = [1, 0], sizes = [15, 16], strides = [1, 1]} : vector<16x16xf32> to vector<15x16xf32>
    %79 = tpu.concatenate %78, %76 in 0 : vector<15x16xf32>, vector<1x16xf32> -> vector<16x16xf32>
    %80 = vector.extract_strided_slice %56 {offsets = [0, 0], sizes = [15, 16], strides = [1, 1]} : vector<16x16xf32> to vector<15x16xf32>
    %81 = tpu.concatenate %66, %80 in 0 : vector<1x16xf32>, vector<15x16xf32> -> vector<16x16xf32>
    %82 = arith.subf %79, %81 : vector<16x16xf32>
    %83 = vector.extract_strided_slice %57 {offsets = [0, 0], sizes = [15, 16], strides = [1, 1]} : vector<16x16xf32> to vector<15x16xf32>
    %84 = tpu.concatenate %67, %83 in 0 : vector<1x16xf32>, vector<15x16xf32> -> vector<16x16xf32>
    %85 = vector.extract_strided_slice %57 {offsets = [1, 0], sizes = [15, 16], strides = [1, 1]} : vector<16x16xf32> to vector<15x16xf32>
    %86 = tpu.concatenate %85, %77 in 0 : vector<15x16xf32>, vector<1x16xf32> -> vector<16x16xf32>
    %87 = arith.addf %84, %86 : vector<16x16xf32>
    %88 = arith.addf %57, %57 : vector<16x16xf32>
    %89 = arith.addf %87, %88 : vector<16x16xf32>
    %90 = arith.mulf %82, %82 : vector<16x16xf32>
    %91 = arith.mulf %89, %89 : vector<16x16xf32>
    %92 = arith.addf %90, %91 : vector<16x16xf32>
    %93 = vector.broadcast %cst : f32 to vector<16x16xf32>
    %94 = arith.addf %92, %93 : vector<16x16xf32>
    %cst_47 = arith.constant 0.000000e+00 : f32
    %95 = vector.broadcast %cst_47 : f32 to vector<16x1xf32>
    %96 = vector.extract_strided_slice %17 {offsets = [0, 0], sizes = [16, 15], strides = [1, 1]} : vector<16x16xf32> to vector<16x15xf32>
    %97 = tpu.concatenate %95, %96 in 1 : vector<16x1xf32>, vector<16x15xf32> -> vector<16x16xf32>
    %98 = vector.extract_strided_slice %17 {offsets = [0, 1], sizes = [16, 15], strides = [1, 1]} : vector<16x16xf32> to vector<16x15xf32>
    %cst_48 = arith.constant 0.000000e+00 : f32
    %99 = vector.broadcast %cst_48 : f32 to vector<16x1xf32>
    %100 = tpu.concatenate %98, %99 in 1 : vector<16x15xf32>, vector<16x1xf32> -> vector<16x16xf32>
    %101 = arith.addf %97, %100 : vector<16x16xf32>
    %102 = arith.addf %17, %17 : vector<16x16xf32>
    %103 = arith.addf %101, %102 : vector<16x16xf32>
    %104 = arith.subf %100, %97 : vector<16x16xf32>
    %cst_49 = arith.constant 0.000000e+00 : f32
    %105 = vector.broadcast %cst_49 : f32 to vector<1x1xf32>
    %106 = vector.extract_strided_slice %31 {offsets = [0, 0], sizes = [1, 15], strides = [1, 1]} : vector<1x16xf32> to vector<1x15xf32>
    %107 = tpu.concatenate %105, %106 in 1 : vector<1x1xf32>, vector<1x15xf32> -> vector<1x16xf32>
    %108 = vector.extract_strided_slice %31 {offsets = [0, 1], sizes = [1, 15], strides = [1, 1]} : vector<1x16xf32> to vector<1x15xf32>
    %cst_50 = arith.constant 0.000000e+00 : f32
    %109 = vector.broadcast %cst_50 : f32 to vector<1x1xf32>
    %110 = tpu.concatenate %108, %109 in 1 : vector<1x15xf32>, vector<1x1xf32> -> vector<1x16xf32>
    %111 = arith.addf %107, %110 : vector<1x16xf32>
    %112 = arith.addf %31, %31 : vector<1x16xf32>
    %113 = arith.addf %111, %112 : vector<1x16xf32>
    %114 = arith.subf %110, %107 : vector<1x16xf32>
    %cst_51 = arith.constant 0.000000e+00 : f32
    %115 = vector.broadcast %cst_51 : f32 to vector<1x1xf32>
    %116 = vector.extract_strided_slice %34 {offsets = [0, 0], sizes = [1, 15], strides = [1, 1]} : vector<1x16xf32> to vector<1x15xf32>
    %117 = tpu.concatenate %115, %116 in 1 : vector<1x1xf32>, vector<1x15xf32> -> vector<1x16xf32>
    %118 = vector.extract_strided_slice %34 {offsets = [0, 1], sizes = [1, 15], strides = [1, 1]} : vector<1x16xf32> to vector<1x15xf32>
    %cst_52 = arith.constant 0.000000e+00 : f32
    %119 = vector.broadcast %cst_52 : f32 to vector<1x1xf32>
    %120 = tpu.concatenate %118, %119 in 1 : vector<1x15xf32>, vector<1x1xf32> -> vector<1x16xf32>
    %121 = arith.addf %117, %120 : vector<1x16xf32>
    %122 = arith.addf %34, %34 : vector<1x16xf32>
    %123 = arith.addf %121, %122 : vector<1x16xf32>
    %124 = arith.subf %120, %117 : vector<1x16xf32>
    %125 = vector.extract_strided_slice %103 {offsets = [1, 0], sizes = [15, 16], strides = [1, 1]} : vector<16x16xf32> to vector<15x16xf32>
    %126 = tpu.concatenate %125, %123 in 0 : vector<15x16xf32>, vector<1x16xf32> -> vector<16x16xf32>
    %127 = vector.extract_strided_slice %103 {offsets = [0, 0], sizes = [15, 16], strides = [1, 1]} : vector<16x16xf32> to vector<15x16xf32>
    %128 = tpu.concatenate %113, %127 in 0 : vector<1x16xf32>, vector<15x16xf32> -> vector<16x16xf32>
    %129 = arith.subf %126, %128 : vector<16x16xf32>
    %130 = vector.extract_strided_slice %104 {offsets = [0, 0], sizes = [15, 16], strides = [1, 1]} : vector<16x16xf32> to vector<15x16xf32>
    %131 = tpu.concatenate %114, %130 in 0 : vector<1x16xf32>, vector<15x16xf32> -> vector<16x16xf32>
    %132 = vector.extract_strided_slice %104 {offsets = [1, 0], sizes = [15, 16], strides = [1, 1]} : vector<16x16xf32> to vector<15x16xf32>
    %133 = tpu.concatenate %132, %124 in 0 : vector<15x16xf32>, vector<1x16xf32> -> vector<16x16xf32>
    %134 = arith.addf %131, %133 : vector<16x16xf32>
    %135 = arith.addf %104, %104 : vector<16x16xf32>
    %136 = arith.addf %134, %135 : vector<16x16xf32>
    %137 = arith.mulf %129, %129 : vector<16x16xf32>
    %138 = arith.mulf %136, %136 : vector<16x16xf32>
    %139 = arith.addf %137, %138 : vector<16x16xf32>
    %140 = vector.broadcast %cst : f32 to vector<16x16xf32>
    %141 = arith.addf %139, %140 : vector<16x16xf32>
    %142 = arith.mulf %94, %141 : vector<16x16xf32>
    %143 = math.sqrt %142 : vector<16x16xf32>
    %144 = tpu.iota {dimensions = array<i32: 0>} : vector<16x16xi32>
    %145 = vector.broadcast %13 : i32 to vector<16x16xi32>
    %146 = arith.addi %144, %145 : vector<16x16xi32>
    %147 = tpu.iota {dimensions = array<i32: 1>} : vector<16x16xi32>
    %c15_i32_53 = arith.constant 15 : i32
    %148 = vector.broadcast %c15_i32_53 : i32 to vector<16x16xi32>
    %149 = arith.cmpi slt, %146, %148 : vector<16x16xi32>
    %150 = vector.extract_strided_slice %17 {offsets = [1, 0], sizes = [15, 16], strides = [1, 1]} : vector<16x16xf32> to vector<15x16xf32>
    %151 = tpu.concatenate %150, %34 in 0 : vector<15x16xf32>, vector<1x16xf32> -> vector<16x16xf32>
    %152 = arith.subf %151, %17 : vector<16x16xf32>
    %cst_54 = arith.constant 0.000000e+00 : f32
    %153 = vector.broadcast %cst_54 : f32 to vector<16x16xf32>
    %154 = arith.select %149, %152, %153 : vector<16x16xi1>, vector<16x16xf32>
    %c15_i32_55 = arith.constant 15 : i32
    %155 = vector.broadcast %c15_i32_55 : i32 to vector<16x16xi32>
    %156 = arith.cmpi slt, %147, %155 : vector<16x16xi32>
    %157 = vector.extract_strided_slice %17 {offsets = [0, 1], sizes = [16, 15], strides = [1, 1]} : vector<16x16xf32> to vector<16x15xf32>
    %cst_56 = arith.constant 0.000000e+00 : f32
    %158 = vector.broadcast %cst_56 : f32 to vector<16x1xf32>
    %159 = tpu.concatenate %157, %158 in 1 : vector<16x15xf32>, vector<16x1xf32> -> vector<16x16xf32>
    %160 = arith.subf %159, %17 : vector<16x16xf32>
    %cst_57 = arith.constant 0.000000e+00 : f32
    %161 = vector.broadcast %cst_57 : f32 to vector<16x16xf32>
    %162 = arith.select %156, %160, %161 : vector<16x16xi1>, vector<16x16xf32>
    %163 = vector.shape_cast %143 : vector<16x16xf32> to vector<1x16x16xf32>
    %cst_58 = arith.constant dense<0.000000e+00> : vector<1xf32>
    %164 = vector.multi_reduction <add>, %163, %cst_58 [1, 2] : vector<1x16x16xf32> to vector<1xf32>
    %165 = vector.shape_cast %164 : vector<1xf32> to vector<1x1x1xf32>
    %166 = vector.extract %165[0, 0, 0] : f32 from vector<1x1x1xf32>
    %167 = arith.addf %cst_14, %166 : f32
    %168 = arith.mulf %154, %154 : vector<16x16xf32>
    %169 = vector.shape_cast %168 : vector<16x16xf32> to vector<1x16x16xf32>
    %cst_59 = arith.constant dense<0.000000e+00> : vector<1xf32>
    %170 = vector.multi_reduction <add>, %169, %cst_59 [1, 2] : vector<1x16x16xf32> to vector<1xf32>
    %171 = vector.shape_cast %170 : vector<1xf32> to vector<1x1x1xf32>
    %172 = vector.extract %171[0, 0, 0] : f32 from vector<1x1x1xf32>
    %173 = arith.addf %cst_15, %172 : f32
    %174 = arith.mulf %162, %162 : vector<16x16xf32>
    %175 = vector.shape_cast %174 : vector<16x16xf32> to vector<1x16x16xf32>
    %cst_60 = arith.constant dense<0.000000e+00> : vector<1xf32>
    %176 = vector.multi_reduction <add>, %175, %cst_60 [1, 2] : vector<1x16x16xf32> to vector<1xf32>
    %177 = vector.shape_cast %176 : vector<1xf32> to vector<1x1x1xf32>
    %178 = vector.extract %177[0, 0, 0] : f32 from vector<1x1x1xf32>
    %179 = arith.addf %173, %178 : f32
    %c1_i32_61 = arith.constant 1 : i32
    %cst_62 = arith.constant -1.000000e+00 : f32
    %180 = arith.mulf %cst_62, %167 : f32
    %181 = arith.addf %180, %179 : f32
    %cst_63 = arith.constant 0.001953125 : f32
    %182 = arith.mulf %181, %cst_63 : f32
    %183 = vector.broadcast %182 : f32 to vector<8x128xf32>
    %c0_64 = arith.constant 0 : index
    %c0_65 = arith.constant 0 : index
    %c0_66 = arith.constant 0 : index
    %184 = vector.load %arg3[%c0_64, %c0_65, %c0_66] : memref<1x8x128xf32, #tpu.memory_space<vmem>>, vector<1x8x128xf32>
    %185 = vector.shape_cast %184 : vector<1x8x128xf32> to vector<8x128xf32>
    %186 = vector.shape_cast %183 : vector<8x128xf32> to vector<1x8x128xf32>
    tpu.vector_store %arg3[%c0_64, %c0_65, %c0_66], %186 {strides = array<i32>} : memref<1x8x128xf32, #tpu.memory_space<vmem>>, vector<1x8x128xf32>,
    return
  }
  func.func @transform_0(%arg0: i32) -> (i32, i32, i32, i32) {
    %c0_i32 = arith.constant 0 : i32
    %c0_i32_0 = arith.constant 0 : i32
    %c0_i32_1 = arith.constant 0 : i32
    %c0_i32_2 = arith.constant 0 : i32
    return %arg0, %c0_i32, %c0_i32_0, %c0_i32_1 : i32, i32, i32, i32
  }
  func.func @transform_1(%arg0: i32) -> (i32, i32, i32, i32) {
    %c0_i32 = arith.constant 0 : i32
    %c0_i32_0 = arith.constant 0 : i32
    %c0_i32_1 = arith.constant 0 : i32
    %c0_i32_2 = arith.constant 0 : i32
    return %arg0, %c0_i32, %c0_i32_0, %c0_i32_1 : i32, i32, i32, i32
  }
  func.func @transform_2(%arg0: i32) -> (i32, i32, i32) {
    %c0_i32 = arith.constant 0 : i32
    %c0_i32_0 = arith.constant 0 : i32
    %c0_i32_1 = arith.constant 0 : i32
    return %arg0, %c0_i32, %c0_i32_0 : i32, i32, i32
  }
}

</mosaic_0001>

<llo_original>
// kernel: tpu_custom_call.1
$region0: #{tpu_custom_call.1}
  #allocation0 [shape = 'u32[]', space=smem, size = 0x4, offset = 0x4, fixed_abs, tag = 'smem constant byte address 0x4 - core index']
  #allocation1 [shape = 'u32[144,128]{1,0:T(1,128)}', space=vmem, size = 0x12000, scoped, tag = 'internal scratch']
  %s0 = inlined_call_operand.hbm [shape: f32[16,16], index: 0, kind: input, shape index: {}]
  %s1 = inlined_call_operand.hbm [shape: f32[16,16], index: 1, kind: output, shape index: {}]
  %s2 = sld [smem:[#allocation0]]
  $region18: #{tpu_custom_call.1} parent=0
    _
  %s4 = ssub.s32 1, %s2
  %s5 = scalar_select 0, %s4, %s2
  $region1: #{tpu_custom_call.1} parent=0
    #allocation2 [shape = 'u8[8192]{0}', space=vmem, size = 0x2000, scoped, tag = 'input window, operand 0, single buffered']
    #allocation3 [shape = 's32[1]{0}', space=sflag, size = 0x4, scoped, tag = 'scoped memory for tpu_custom_call.1']
    #allocation4 [shape = 's32[1]{0}', space=sflag, size = 0x4, scoped, tag = 'scoped memory for tpu_custom_call.1']
    #allocation5 [shape = 'u8[8192]{0}', space=vmem, size = 0x2000, scoped, tag = 'output window, operand 0, single buffered']
    %6 = vsyncpa [#allocation3], 0
    %7 = vsyncpa [#allocation4], 0
    // Predicated region
    $region2: #{tpu_custom_call.1} parent=1 // pred_check
      _
    $region3: #{tpu_custom_call.1} parent=1 // pred_check_branch
      %9 = sbr.rel (0) target = $region5
    $region4: #{tpu_custom_call.1} parent=1 // pred_region
      %s11 = ssub.s32 256, 256
      %12 = vsyncadd [#allocation3], %s11
      %s13 = sshll.u32 [#allocation2], 4
      %s14 = int_to_ptr.vmem [resolvable:$true] %s13
      %19 = dma.hbm_to_vmem [thread:$0]  %s0, 256, %s14, [#allocation3], 128, 128, 8
    $region5: #{tpu_custom_call.1} parent=1 // pred_fallthru
      _
    // Predicated region
    $region6: #{tpu_custom_call.1} parent=1 // pred_check
      _
    $region7: #{tpu_custom_call.1} parent=1 // pred_check_branch
      %21 = sbr.rel (0) target = $region9
    $region8: #{tpu_custom_call.1} parent=1 // pred_region
      %22 = dma.done [#allocation3], 256
    $region9: #{tpu_custom_call.1} parent=1 // pred_fallthru
      _
    %v23 = vld [vmem:[#allocation2] sm:$0xff]
    %v24 = vld [vmem:[#allocation2 + $0x8] sm:$0xff]
    %v25 = vrot.slane %v23, 7
    %v26 = vrot.slane %v24, 7
    %v27 = vlaneseq
    %v28 = vshrl.u32 %v27, 7
    %vm29 = vcmp.lt.s32.totalorder %v28, 1
    %v30 = vsel %vm29, %v25, %v26
    %v31 = vsel %vm29, %v26, %v25
    %v32 = vrot.slane %v23, 1
    %v33 = vrot.slane %v24, 1
    %vm34 = vcmp.lt.s32.totalorder %v28, 7
    %v35 = vsel %vm34, %v32, %v33
    %v36 = vsel %vm34, %v33, %v32
    %v37 = vmul.f32 %v35, 2.0
    %v38 = vmul.f32 %v36, 2.0
    %v39 = vadd.f32 %v31, %v37
    %v40 = vadd.f32 %v30, %v38
    %vm41 = vcmask 1047680
    %42 = vrot.lane.b32.xlu0 %v23, 16
    %v43 = vpop.permute.xlu0 %42
    %v44 = vsel %vm41, %v43, %v23
    %45 = vrot.lane.b32.xlu0 %v24, 16
    %v46 = vpop.permute.xlu0 %45
    %v47 = vsel %vm41, %v46, %v24
    %48 = vrot.lane.b32.xlu0 %v44, 16
    %v49 = vpop.permute.xlu0 %48
    %50 = vrot.lane.b32.xlu0 %v47, 16
    %v51 = vpop.permute.xlu0 %50
    %v52 = vsel %vm41, %v49, %v23
    %v53 = vsel %vm41, %v51, %v24
    %v54 = vmul.f32 %v52, 4.0
    %v55 = vmul.f32 %v53, 4.0
    %58 = vrot.lane.b32.xlu0 %v54, 113
    %v59 = vpop.permute.xlu0 %58
    %60 = vrot.lane.b32.xlu0 %v55, 113
    %v61 = vpop.permute.xlu0 %60
    %v64 = vadd.f32 %v39, %v59
    %v65 = vadd.f32 %v40, %v61
    %v66 = vmul.f32 %v52, 8.0
    %v67 = vmul.f32 %v53, 8.0
    %70 = vrot.lane.b32.xlu0 %v66, 127
    %v71 = vpop.permute.xlu0 %70
    %72 = vrot.lane.b32.xlu0 %v67, 127
    %v73 = vpop.permute.xlu0 %72
    %v76 = vadd.f32 %v64, %v71
    %v77 = vadd.f32 %v65, %v73
    %v78 = vmul.f32 %v52, 16.0
    %v79 = vlaneseq
    %v80 = vshrl.u32 %v79, 7
    %v81 = vsub.s32 0, %v80
    %v82 = vrot.slane %v78, %v81
    %84 = vrot.lane.b32.xlu0 %v82, 113
    %v85 = vpop.permute.xlu0 %84
    %v87 = vadd.f32 %v76, %v85
    %v88 = vadd.f32 %v77, %v85
    %v89 = vmul.f32 %v52, 32.0
    %v90 = vlaneseq
    %v91 = vshrl.u32 %v90, 7
    %v92 = vsub.s32 0, %v91
    %v93 = vrot.slane %v89, %v92
    %95 = vrot.lane.b32.xlu0 %v93, 127
    %v96 = vpop.permute.xlu0 %95
    %v98 = vadd.f32 %v87, %v96
    %v99 = vadd.f32 %v88, %v96
    %vm100 = vcmask 130048
    %101 = vst.msk [vmem:[#allocation5] sm:$0xff] %vm100, %v98
    %102 = vst.msk [vmem:[#allocation5 + $0x8] sm:$0xff] %vm100, %v99
    // Predicated region
    $region10: #{tpu_custom_call.1} parent=1 // pred_check
      _
    $region11: #{tpu_custom_call.1} parent=1 // pred_check_branch
      %104 = sbr.rel (0) target = $region13
    $region12: #{tpu_custom_call.1} parent=1 // pred_region
      %s106 = ssub.s32 256, 256
      %107 = vsyncadd [#allocation4], %s106
      %s108 = sshll.u32 [#allocation5], 4
      %s109 = int_to_ptr.vmem [resolvable:$true] %s108
      %114 = dma.vmem_to_hbm [thread:$0]  %s109, 256, %s1, [#allocation4], 128, 128, 8
    $region13: #{tpu_custom_call.1} parent=1 // pred_fallthru
      _
    // Predicated region
    $region14: #{tpu_custom_call.1} parent=1 // pred_check
      _
    $region15: #{tpu_custom_call.1} parent=1 // pred_check_branch
      %116 = sbr.rel (0) target = $region17
    $region16: #{tpu_custom_call.1} parent=1 // pred_region
      %117 = dma.done [#allocation4], 256
    $region17: #{tpu_custom_call.1} parent=1 // pred_fallthru
      _
    %118 = vsyncpa [#allocation3], 1
    %119 = vsyncpa [#allocation4], 1

// kernel: tpu_custom_call.1
$region0: #{tpu_custom_call.1}
  #allocation0 [shape = 'u32[]', space=smem, size = 0x4, offset = 0x4, fixed_abs, tag = 'smem constant byte address 0x4 - core index']
  #allocation1 [shape = 'u32[144,128]{1,0:T(1,128)}', space=vmem, size = 0x12000, scoped, tag = 'internal scratch']
  #allocation2 [shape = 'f32[16,16]{1,0:T(8,128)}', space=vmem, size = 0x2000, scoped, tag = 'scratch operand']
  %s0 = inlined_call_operand.hbm [shape: f32[2,1,16,16], index: 0, kind: input, shape index: {}]
  %s1 = inlined_call_operand.hbm [shape: f32[2,4,16,16], index: 1, kind: input, shape index: {}]
  %s2 = inlined_call_operand.hbm [shape: f32[2,8,128], index: 2, kind: output, shape index: {}]
  %s3 = sld [smem:[#allocation0]]
  $region49: #{tpu_custom_call.1} parent=0
    _
  %s5 = ssub.s32 1, %s3
  %s6 = scalar_select 0, %s5, %s3
  $region1: #{tpu_custom_call.1} parent=0
    #allocation3 [shape = 'u8[16384]{0}', space=vmem, size = 0x4000, scoped, tag = 'input window, operand 0']
    #allocation4 [shape = 's32[2]{0}', space=sflag, size = 0x8, scoped, tag = 'scoped memory for tpu_custom_call.1']
    #allocation5 [shape = 's32[2]{0}', space=sflag, size = 0x8, scoped, tag = 'scoped memory for tpu_custom_call.1']
    #allocation6 [shape = 'u8[65536]{0}', space=vmem, size = 0x10000, scoped, tag = 'input window, operand 1']
    #allocation7 [shape = 's32[2]{0}', space=sflag, size = 0x8, scoped, tag = 'scoped memory for tpu_custom_call.1']
    #allocation8 [shape = 'u8[8192]{0}', space=vmem, size = 0x2000, scoped, tag = 'output window, operand 0']
    %7 = vsyncpa [#allocation4], 0
    %s8 = scalar_lea.sflag [#allocation4], 1
    %9 = vsyncpa %s8, 0
    %10 = vsyncpa [#allocation7], 0
    %s11 = scalar_lea.sflag [#allocation7], 1
    %12 = vsyncpa %s11, 0
    %13 = vsyncpa [#allocation5], 0
    %s14 = scalar_lea.sflag [#allocation5], 1
    %15 = vsyncpa %s14, 0
    loop: start=0, step=1, limit=4
    $region2: #{tpu_custom_call.1} parent=1 // loop_pre_header
      _
    $region3: #{tpu_custom_call.1} parent=1 // loop_header
      %s17 = sphi 0, %s21
      %p18 = scmp.ge.s32.totalorder %s17, 4
      %s27 = sphi 0, %s29
      %s30 = sphi 0, %s27
      %s31 = sphi 0, %s30
      %s47 = sphi 0, %s31
      %s53 = sphi 0, %s55
      %s56 = sphi 0, %s53
      %s57 = sphi 0, %s56
      %s73 = sphi 0, %s57
      %s79 = sphi 0, %s81
      %s82 = sphi 0, %s79
      %s83 = sphi 0, %s82
      %s99 = sphi 0, %s83
    $region4: #{tpu_custom_call.1} parent=1 // loop_header_branch
      %20 = sbr.rel (%p18) target = $region8
    $region5: #{tpu_custom_call.1} parent=1 // loop_body
      %s22 = ssub.s32 %s17, 1
      %s23 = ssub.s32 %s17, 2
      %s24 = sadd.s32 %s17, 1
      %s25 = ssub.s32 %s17, %s24
      %p26 = scmp.eq.s32.totalorder %s25, 0
      %s28 = sadd.s32 %s27, 1
      %s29 = scalar_select %p26, %s27, %s28
      %p32 = pneg %p26
      %p33 = scmp.eq.s32.totalorder %s17, 1
      %p34 = por %p32, %p33
      %p35 = scmp.ne.s32.totalorder %s27, %s30
      %p36 = scmp.eq.s32.totalorder %s17, 0
      %p37 = por %p35, %p36
      %p38 = scmp.ne.s32.totalorder %s27, %s30
      %p39 = scmp.eq.s32.totalorder %s22, 1
      %p40 = por %p38, %p39
      %p41 = scmp.ne.s32.totalorder %s30, %s31
      %p42 = scmp.eq.s32.totalorder %s22, 0
      %p43 = por %p41, %p42
      %p44 = scmp.ne.s32.totalorder %s30, %s31
      %p45 = scmp.eq.s32.totalorder %s23, 1
      %p46 = por %p44, %p45
      %p48 = scmp.ne.s32.totalorder %s31, %s47
      %p49 = scmp.eq.s32.totalorder %s23, 0
      %p50 = por %p48, %p49
      %s51 = ssub.s32 %s17, %s24
      %p52 = scmp.eq.s32.totalorder %s51, 0
      %s54 = sadd.s32 %s53, 1
      %s55 = scalar_select %p52, %s53, %s54
      %p58 = pneg %p52
      %p59 = scmp.eq.s32.totalorder %s17, 1
      %p60 = por %p58, %p59
      %p61 = scmp.ne.s32.totalorder %s53, %s56
      %p62 = scmp.eq.s32.totalorder %s17, 0
      %p63 = por %p61, %p62
      %p64 = scmp.ne.s32.totalorder %s53, %s56
      %p65 = scmp.eq.s32.totalorder %s22, 1
      %p66 = por %p64, %p65
      %p67 = scmp.ne.s32.totalorder %s56, %s57
      %p68 = scmp.eq.s32.totalorder %s22, 0
      %p69 = por %p67, %p68
      %p70 = scmp.ne.s32.totalorder %s56, %s57
      %p71 = scmp.eq.s32.totalorder %s23, 1
      %p72 = por %p70, %p71
      %p74 = scmp.ne.s32.totalorder %s57, %s73
      %p75 = scmp.eq.s32.totalorder %s23, 0
      %p76 = por %p74, %p75
      %s77 = ssub.s32 %s17, %s24
      %p78 = scmp.eq.s32.totalorder %s77, 0
      %s80 = sadd.s32 %s79, 1
      %s81 = scalar_select %p78, %s79, %s80
      %p84 = pneg %p78
      %p85 = scmp.eq.s32.totalorder %s17, 1
      %p86 = por %p84, %p85
      %p87 = scmp.ne.s32.totalorder %s79, %s82
      %p88 = scmp.eq.s32.totalorder %s17, 0
      %p89 = por %p87, %p88
      %p90 = scmp.ne.s32.totalorder %s79, %s82
      %p91 = scmp.eq.s32.totalorder %s22, 1
      %p92 = por %p90, %p91
      %p93 = scmp.ne.s32.totalorder %s82, %s83
      %p94 = scmp.eq.s32.totalorder %s22, 0
      %p95 = por %p93, %p94
      %p96 = scmp.ne.s32.totalorder %s82, %s83
      %p97 = scmp.eq.s32.totalorder %s23, 1
      %p98 = por %p96, %p97
      %p100 = scmp.ne.s32.totalorder %s83, %s99
      %p101 = scmp.eq.s32.totalorder %s23, 0
      %p102 = por %p100, %p101
      %p103 = scmp.le.s32.totalorder 1, %s17
      %p104 = scmp.lt.s32.totalorder %s17, 3
      %p105 = pnand %p103, %p104
      %p106 = pneg %p105
      // Predicated region
      $region9: #{tpu_custom_call.1} parent=5 // pred_check
        _
      $region10: #{tpu_custom_call.1} parent=5 // pred_check_branch
        %108 = sbr.rel (%p105) target = $region12
      $region11: #{tpu_custom_call.1} parent=5 // pred_region
        %s109 = ssub.s32 %s17, 1
      $region12: #{tpu_custom_call.1} parent=5 // pred_fallthru
        _
      %p110 = scmp.lt.s32.totalorder %s17, 2
      // Predicated region
      $region13: #{tpu_custom_call.1} parent=5 // pred_check
        %p111 = pneg %p110
      $region14: #{tpu_custom_call.1} parent=5 // pred_check_branch
        %113 = sbr.rel (%p111) target = $region16
      $region15: #{tpu_custom_call.1} parent=5 // pred_region
        // Predicated region
        $region17: #{tpu_custom_call.1} parent=15 // pred_check
          %p114 = pneg %p37
        $region18: #{tpu_custom_call.1} parent=15 // pred_check_branch
          %116 = sbr.rel (%p114) target = $region20
        $region19: #{tpu_custom_call.1} parent=15 // pred_region
          %s117 = sand.u32 %s27, 1
          %s118 = scalar_lea.sflag [#allocation4], %s117
          %s119 = sand.u32 %s27, 1
          %s120 = smul.addr %s119, 16
          %s121 = scalar_lea.vmem [#allocation3], %s120
          %s123 = ssub.s32 256, 256
          %124 = vsyncadd %s118, %s123
          %s125 = smul.addr %s17, 2
          %s126 = smul.addr %s125, 128
          %s127 = scalar_lea.hbm %s0, %s126
          %s128 = sshll.u32 %s121, 4
          %s129 = int_to_ptr.vmem [resolvable:$true] %s128
          %134 = dma.hbm_to_vmem [thread:$0]  %s127, 256, %s129, %s118, 128, 128, 8
        $region20: #{tpu_custom_call.1} parent=15 // pred_fallthru
          _
        // Predicated region
        $region21: #{tpu_custom_call.1} parent=15 // pred_check
          %p135 = pneg %p63
        $region22: #{tpu_custom_call.1} parent=15 // pred_check_branch
          %137 = sbr.rel (%p135) target = $region24
        $region23: #{tpu_custom_call.1} parent=15 // pred_region
          %s138 = sand.u32 %s53, 1
          %s139 = scalar_lea.sflag [#allocation7], %s138
          %s140 = sand.u32 %s53, 1
          %s141 = smul.addr %s140, 64
          %s142 = scalar_lea.vmem [#allocation6], %s141
          %s144 = ssub.s32 1024, 1024
          %145 = vsyncadd %s139, %s144
          %s146 = smul.addr %s17, 8
          %s147 = smul.addr %s146, 128
          %s148 = scalar_lea.hbm %s1, %s147
          %s149 = sshll.u32 %s142, 4
          %s150 = int_to_ptr.vmem [resolvable:$true] %s149
          %155 = dma.hbm_to_vmem [thread:$0]  %s148, 1024, %s150, %s139, 128, 128, 8
        $region24: #{tpu_custom_call.1} parent=15 // pred_fallthru
          _
      $region16: #{tpu_custom_call.1} parent=5 // pred_fallthru
        _
      %p156 = scmp.le.s32.totalorder 1, %s17
      %p157 = scmp.lt.s32.totalorder %s17, 3
      %p158 = pnand %p156, %p157
      %p159 = pneg %p158
      // Predicated region
      $region25: #{tpu_custom_call.1} parent=5 // pred_check
        _
      $region26: #{tpu_custom_call.1} parent=5 // pred_check_branch
        %161 = sbr.rel (%p158) target = $region28
      $region27: #{tpu_custom_call.1} parent=5 // pred_region
        %s162 = ssub.s32 %s17, 1
        %s163 = sand.u32 %s30, 1
        %s164 = scalar_lea.sflag [#allocation4], %s163
        %s165 = sand.u32 %s30, 1
        %s166 = smul.addr %s165, 16
        %s167 = scalar_lea.vmem [#allocation3], %s166
        // Predicated region
        $region29: #{tpu_custom_call.1} parent=27 // pred_check
          %p168 = pneg %p43
        $region30: #{tpu_custom_call.1} parent=27 // pred_check_branch
          %170 = sbr.rel (%p168) target = $region32
        $region31: #{tpu_custom_call.1} parent=27 // pred_region
          %171 = dma.done %s164, 256
        $region32: #{tpu_custom_call.1} parent=27 // pred_fallthru
          _
        %s172 = sand.u32 %s56, 1
        %s173 = scalar_lea.sflag [#allocation7], %s172
        %s174 = sand.u32 %s56, 1
        %s175 = smul.addr %s174, 64
        %s176 = scalar_lea.vmem [#allocation6], %s175
        // Predicated region
        $region33: #{tpu_custom_call.1} parent=27 // pred_check
          %p177 = pneg %p69
        $region34: #{tpu_custom_call.1} parent=27 // pred_check_branch
          %179 = sbr.rel (%p177) target = $region36
        $region35: #{tpu_custom_call.1} parent=27 // pred_region
          %180 = dma.done %s173, 1024
        $region36: #{tpu_custom_call.1} parent=27 // pred_fallthru
          _
        %s181 = sand.u32 %s30, 1
        %s182 = scalar_lea.sflag [#allocation4], %s181
        %s183 = sand.u32 %s30, 1
        %s184 = smul.addr %s183, 16
        %s185 = scalar_lea.vmem [#allocation3], %s184
        %p186 = pneg %p43
        %p187 = pneg %p40
        %s188 = sand.u32 %s56, 1
        %s189 = scalar_lea.sflag [#allocation7], %s188
        %s190 = sand.u32 %s56, 1
        %s191 = smul.addr %s190, 64
        %s192 = scalar_lea.vmem [#allocation6], %s191
        %p193 = pneg %p69
        %p194 = pneg %p66
        %p195 = pneg %p95
        %p196 = pneg %p92
        %s197 = sand.u32 %s82, 1
        %s198 = scalar_lea.sflag [#allocation5], %s197
        %s199 = sand.u32 %s82, 1
        %s200 = smul.addr %s199, 8
        %s201 = scalar_lea.vmem [#allocation8], %s200
        %v202 = vld [vmem:[%s176] sm:$0xff]
        %v203 = vld [vmem:[%s176 + $0x8] sm:$0xff]
        %s204 = scalar_lea.vmem %s176, 16 [#allocation6]
        %v205 = vld [vmem:[%s204] sm:$0xff]
        %v206 = vld [vmem:[%s204 + $0x8] sm:$0xff]
        %v207 = vadd.f32 %v202, %v205
        %v208 = vadd.f32 %v203, %v206
        %s209 = scalar_lea.vmem %s176, 32 [#allocation6]
        %v210 = vld [vmem:[%s209] sm:$0xff]
        %v211 = vld [vmem:[%s209 + $0x8] sm:$0xff]
        %v212 = vadd.f32 %v207, %v210
        %v213 = vadd.f32 %v208, %v211
        %s214 = scalar_lea.vmem %s176, 48 [#allocation6]
        %v215 = vld [vmem:[%s214] sm:$0xff]
        %v216 = vld [vmem:[%s214 + $0x8] sm:$0xff]
        %v217 = vadd.f32 %v212, %v215
        %v218 = vadd.f32 %v213, %v216
        %vm219 = vcmask 130048
        %220 = vst.msk [vmem:[#allocation2] sm:$0xff] %vm219, %v217
        %221 = vst.msk [vmem:[#allocation2 + $0x8] sm:$0xff] %vm219, %v218
        %s222 = sadd.s32 0, 16
        %v223 = vld [vmem:[%s167] sm:$0xff]
        %v224 = vld [vmem:[%s167 + $0x8] sm:$0xff]
        %v225 = vld [vmem:[#allocation2] sm:$0xff]
        %v226 = vld [vmem:[#allocation2 + $0x8] sm:$0xff]
        %s227 = ssub.s32 0, 1
        %p228 = scmp.gt.s32.totalorder %s227, 0
        %s229 = scalar_select %p228, %s227, 0
        %s230 = scalar_lea.vmem %s167, %s229 [#allocation3]
        %v231 = vld [vmem:[%s230] sm:$0x1]
        %p232 = scmp.lt.s32.totalorder %s222, 15
        %s233 = scalar_select %p232, %s222, 15
        %s234 = scalar_lea.vmem %s167, %s233 [#allocation3]
        %v235 = vld [vmem:[%s234] sm:$0x1]
        %p236 = scmp.gt.s32.totalorder 0, 0
        %s237 = scalar_select %p236, 1, 0
        %v238 = vstv %s237
        %vm239 = vcmp.eq.s32.totalorder %v238, 1
        %v240 = vsel %vm239, %v231, 0.0
        %p241 = scmp.lt.s32.totalorder %s222, 16
        %s242 = scalar_select %p241, 1, 0
        %v243 = vstv %s242
        %vm244 = vcmp.eq.s32.totalorder %v243, 1
        %v245 = vsel %vm244, %v235, 0.0
        %s246 = scalar_lea.vmem [#allocation2], %s229
        %v247 = vld [vmem:[%s246] sm:$0x1]
        %s248 = scalar_lea.vmem [#allocation2], %s233
        %v249 = vld [vmem:[%s248] sm:$0x1]
        %v250 = vsel %vm239, %v247, 0.0
        %v251 = vsel %vm244, %v249, 0.0
        %254 = vrot.lane.b32.xlu0 %v225, 1
        %v255 = vpop.permute.xlu0 %254
        %256 = vrot.lane.b32.xlu0 %v226, 1
        %v257 = vpop.permute.xlu0 %256
        %vm260 = vcmask 7168
        %v261 = vsel %vm260, 0.0, %v255
        %v262 = vsel %vm260, 0.0, %v257
        %263 = vrot.lane.b32.xlu0 %v225, 127
        %v264 = vpop.permute.xlu0 %263
        %265 = vrot.lane.b32.xlu0 %v226, 127
        %v266 = vpop.permute.xlu0 %265
        %vm269 = vcmask 121856
        %v270 = vsel %vm269, %v264, 0.0
        %v271 = vsel %vm269, %v266, 0.0
        %v272 = vadd.f32 %v261, %v270
        %v273 = vadd.f32 %v262, %v271
        %v274 = vadd.f32 %v225, %v225
        %v275 = vadd.f32 %v226, %v226
        %v276 = vadd.f32 %v272, %v274
        %v277 = vadd.f32 %v273, %v275
        %v278 = vsub.f32 %v270, %v261
        %v279 = vsub.f32 %v271, %v262
        %281 = vrot.lane.b32.xlu0 %v250, 1
        %v282 = vpop.permute.xlu0 %281
        %v284 = vsel %vm260, 0.0, %v282
        %285 = vrot.lane.b32.xlu0 %v250, 127
        %v286 = vpop.permute.xlu0 %285
        %v288 = vsel %vm269, %v286, 0.0
        %v289 = vadd.f32 %v284, %v288
        %v290 = vadd.f32 %v250, %v250
        %v291 = vadd.f32 %v289, %v290
        %v292 = vsub.f32 %v288, %v284
        %294 = vrot.lane.b32.xlu0 %v251, 1
        %v295 = vpop.permute.xlu0 %294
        %v297 = vsel %vm260, 0.0, %v295
        %298 = vrot.lane.b32.xlu0 %v251, 127
        %v299 = vpop.permute.xlu0 %298
        %v301 = vsel %vm269, %v299, 0.0
        %v302 = vadd.f32 %v297, %v301
        %v303 = vadd.f32 %v251, %v251
        %v304 = vadd.f32 %v302, %v303
        %v305 = vsub.f32 %v301, %v297
        %vm308 = vcmask 1046528
        %v309 = vrot.slane %v276, 1
        %v310 = vrot.slane %v277, 1
        %v311 = vsel %vm308, %v309, %v310
        %v315 = vrot.slane %v304, 1
        %v317 = vsel %vm308, %v310, %v315
        %vm318 = vcmask 1040384
        %v319 = vrot.slane %v276, 7
        %v320 = vrot.slane %v277, 7
        %v321 = vsel %vm318, %v319, %v320
        %v324 = vsel %vm318, %v291, %v319
        %v325 = vsub.f32 %v311, %v324
        %v326 = vsub.f32 %v317, %v321
        %v329 = vrot.slane %v278, 7
        %v330 = vrot.slane %v279, 7
        %v331 = vsel %vm318, %v329, %v330
        %v334 = vsel %vm318, %v292, %v329
        %v335 = vrot.slane %v278, 1
        %v336 = vrot.slane %v279, 1
        %v337 = vsel %vm308, %v335, %v336
        %v341 = vrot.slane %v305, 1
        %v343 = vsel %vm308, %v336, %v341
        %v344 = vadd.f32 %v334, %v337
        %v345 = vadd.f32 %v331, %v343
        %v346 = vadd.f32 %v278, %v278
        %v347 = vadd.f32 %v279, %v279
        %v348 = vadd.f32 %v344, %v346
        %v349 = vadd.f32 %v345, %v347
        %v350 = vmul.f32 %v325, %v325
        %v351 = vmul.f32 %v326, %v326
        %v352 = vmul.f32 %v348, %v348
        %v353 = vmul.f32 %v349, %v349
        %v354 = vadd.f32 %v350, %v352
        %v355 = vadd.f32 %v351, %v353
        %v356 = vadd.f32 %v354, 1e-05
        %v357 = vadd.f32 %v355, 1e-05
        %360 = vrot.lane.b32.xlu0 %v223, 1
        %v361 = vpop.permute.xlu0 %360
        %362 = vrot.lane.b32.xlu0 %v224, 1
        %v363 = vpop.permute.xlu0 %362
        %v366 = vsel %vm260, 0.0, %v361
        %v367 = vsel %vm260, 0.0, %v363
        %368 = vrot.lane.b32.xlu0 %v223, 127
        %v369 = vpop.permute.xlu0 %368
        %370 = vrot.lane.b32.xlu0 %v224, 127
        %v371 = vpop.permute.xlu0 %370
        %v374 = vsel %vm269, %v369, 0.0
        %v375 = vsel %vm269, %v371, 0.0
        %v376 = vadd.f32 %v366, %v374
        %v377 = vadd.f32 %v367, %v375
        %v378 = vadd.f32 %v223, %v223
        %v379 = vadd.f32 %v224, %v224
        %v380 = vadd.f32 %v376, %v378
        %v381 = vadd.f32 %v377, %v379
        %v382 = vsub.f32 %v374, %v366
        %v383 = vsub.f32 %v375, %v367
        %385 = vrot.lane.b32.xlu0 %v240, 1
        %v386 = vpop.permute.xlu0 %385
        %v388 = vsel %vm260, 0.0, %v386
        %389 = vrot.lane.b32.xlu0 %v240, 127
        %v390 = vpop.permute.xlu0 %389
        %v392 = vsel %vm269, %v390, 0.0
        %v393 = vadd.f32 %v388, %v392
        %v394 = vadd.f32 %v240, %v240
        %v395 = vadd.f32 %v393, %v394
        %v396 = vsub.f32 %v392, %v388
        %398 = vrot.lane.b32.xlu0 %v245, 1
        %v399 = vpop.permute.xlu0 %398
        %v401 = vsel %vm260, 0.0, %v399
        %402 = vrot.lane.b32.xlu0 %v245, 127
        %v403 = vpop.permute.xlu0 %402
        %v405 = vsel %vm269, %v403, 0.0
        %v406 = vadd.f32 %v401, %v405
        %v407 = vadd.f32 %v245, %v245
        %v408 = vadd.f32 %v406, %v407
        %v409 = vsub.f32 %v405, %v401
        %v412 = vrot.slane %v380, 1
        %v413 = vrot.slane %v381, 1
        %v414 = vsel %vm308, %v412, %v413
        %v418 = vrot.slane %v408, 1
        %v420 = vsel %vm308, %v413, %v418
        %v421 = vrot.slane %v380, 7
        %v422 = vrot.slane %v381, 7
        %v423 = vsel %vm318, %v421, %v422
        %v426 = vsel %vm318, %v395, %v421
        %v427 = vsub.f32 %v414, %v426
        %v428 = vsub.f32 %v420, %v423
        %v431 = vrot.slane %v382, 7
        %v432 = vrot.slane %v383, 7
        %v433 = vsel %vm318, %v431, %v432
        %v436 = vsel %vm318, %v396, %v431
        %v437 = vrot.slane %v382, 1
        %v438 = vrot.slane %v383, 1
        %v439 = vsel %vm308, %v437, %v438
        %v443 = vrot.slane %v409, 1
        %v445 = vsel %vm308, %v438, %v443
        %v446 = vadd.f32 %v436, %v439
        %v447 = vadd.f32 %v433, %v445
        %v448 = vadd.f32 %v382, %v382
        %v449 = vadd.f32 %v383, %v383
        %v450 = vadd.f32 %v446, %v448
        %v451 = vadd.f32 %v447, %v449
        %v452 = vmul.f32 %v427, %v427
        %v453 = vmul.f32 %v428, %v428
        %v454 = vmul.f32 %v450, %v450
        %v455 = vmul.f32 %v451, %v451
        %v456 = vadd.f32 %v452, %v454
        %v457 = vadd.f32 %v453, %v455
        %v458 = vadd.f32 %v456, 1e-05
        %v459 = vadd.f32 %v457, 1e-05
        %v460 = vmul.f32 %v356, %v458
        %v461 = vmul.f32 %v357, %v459
        %v462 = vrsqrt.pop %v460
        %v463 = vmul.f32 %v460, %v462
        %vm464 = vcmp.eq.f32.partialorder %v460, inf
        %v465 = vsel %vm464, %v460, %v463
        %vm466 = vcmp.eq.f32.partialorder %v460, 0.0
        %v467 = vand.u32 %v460, 2147483648
        %v468 = vsel %vm466, %v467, %v465
        %v469 = vrsqrt.pop %v461
        %v470 = vmul.f32 %v461, %v469
        %vm471 = vcmp.eq.f32.partialorder %v461, inf
        %v472 = vsel %vm471, %v461, %v470
        %vm473 = vcmp.eq.f32.partialorder %v461, 0.0
        %v474 = vand.u32 %v461, 2147483648
        %v475 = vsel %vm473, %v474, %v472
        %v476 = vlaneseq
        %v477 = vshrl.u32 %v476, 7
        %v478 = vadd.s32 %v477, 8
        %v479 = vstv 0
        %v480 = vadd.s32 %v477, %v479
        %v481 = vadd.s32 %v478, %v479
        %v482 = vlaneseq
        %v483 = vand.u32 %v482, 127
        %vm484 = vcmp.lt.s32.totalorder %v480, 15
        %vm485 = vcmp.lt.s32.totalorder %v481, 15
        %v486 = vrot.slane %v223, 1
        %v487 = vrot.slane %v224, 1
        %v488 = vsel %vm308, %v486, %v487
        %v491 = vrot.slane %v245, 1
        %v493 = vsel %vm308, %v487, %v491
        %v494 = vsub.f32 %v488, %v223
        %v495 = vsub.f32 %v493, %v224
        %v496 = vsel %vm484, %v494, 0.0
        %v497 = vsel %vm485, %v495, 0.0
        %vm498 = vcmp.lt.s32.totalorder %v483, 15
        %v499 = vsub.f32 %v374, %v223
        %v500 = vsub.f32 %v375, %v224
        %v501 = vsel %vm498, %v499, 0.0
        %v502 = vsel %vm498, %v500, 0.0
        %v503 = vsel %vm219, %v468, 0.0
        %v504 = vsel %vm219, %v475, 0.0
        %v505 = vadd.f32 %v503, %v504
        %506 = vadd.xlane.f32.xlu0 %v505
        %v507 = vpop.xlane.xlu0 %506
        %v508 = vrot.slane %v507, 4
        %v509 = vadd.f32 %v507, %v508
        %v510 = vrot.slane %v509, 2
        %v511 = vadd.f32 %v509, %v510
        %v512 = vrot.slane %v511, 1
        %v513 = vadd.f32 %v511, %v512
        %s514 = vtos %v513
        %s515 = sadd.f32 %s514, 0.0
        %v516 = vmul.f32 %v496, %v496
        %v517 = vmul.f32 %v497, %v497
        %v518 = vsel %vm219, %v516, 0.0
        %v519 = vsel %vm219, %v517, 0.0
        %v520 = vadd.f32 %v518, %v519
        %521 = vadd.xlane.f32.xlu0 %v520
        %v522 = vpop.xlane.xlu0 %521
        %v523 = vrot.slane %v522, 4
        %v524 = vadd.f32 %v522, %v523
        %v525 = vrot.slane %v524, 2
        %v526 = vadd.f32 %v524, %v525
        %v527 = vrot.slane %v526, 1
        %v528 = vadd.f32 %v526, %v527
        %s529 = vtos %v528
        %s530 = sadd.f32 %s529, 0.0
        %v531 = vmul.f32 %v501, %v501
        %v532 = vmul.f32 %v502, %v502
        %v533 = vsel %vm219, %v531, 0.0
        %v534 = vsel %vm219, %v532, 0.0
        %v535 = vadd.f32 %v533, %v534
        %536 = vadd.xlane.f32.xlu0 %v535
        %v537 = vpop.xlane.xlu0 %536
        %v538 = vrot.slane %v537, 4
        %v539 = vadd.f32 %v537, %v538
        %v540 = vrot.slane %v539, 2
        %v541 = vadd.f32 %v539, %v540
        %v542 = vrot.slane %v541, 1
        %v543 = vadd.f32 %v541, %v542
        %s544 = vtos %v543
        %s545 = sadd.f32 %s530, %s544
        %s546 = smul.f32 %s515, -1.0
        %s547 = sadd.f32 %s546, %s545
        %s548 = smul.f32 %s547, 0.001953125
        %v549 = vstv %s548
        %550 = vst [vmem:[%s201] sm:$0xff] %v549
        %s551 = sand.u32 %s82, 1
        %s552 = scalar_lea.sflag [#allocation5], %s551
        %s553 = sand.u32 %s82, 1
        %s554 = smul.addr %s553, 8
        %s555 = scalar_lea.vmem [#allocation8], %s554
        // Predicated region
        $region37: #{tpu_custom_call.1} parent=27 // pred_check
          %p556 = pneg %p92
        $region38: #{tpu_custom_call.1} parent=27 // pred_check_branch
          %558 = sbr.rel (%p556) target = $region40
        $region39: #{tpu_custom_call.1} parent=27 // pred_region
          %s560 = ssub.s32 128, 128
          %561 = vsyncadd %s552, %s560
          %s562 = smul.addr %s22, 128
          %s563 = scalar_lea.hbm %s2, %s562
          %s565 = sshll.u32 %s555, 4
          %s566 = int_to_ptr.vmem [resolvable:$true] %s565
          %568 = dma.vmem_to_hbm [thread:$0]  %s566, 128, %s563, %s552
        $region40: #{tpu_custom_call.1} parent=27 // pred_fallthru
          _
      $region28: #{tpu_custom_call.1} parent=5 // pred_fallthru
        _
      %p569 = scmp.le.s32.totalorder 2, %s17
      // Predicated region
      $region41: #{tpu_custom_call.1} parent=5 // pred_check
        %p570 = pneg %p569
      $region42: #{tpu_custom_call.1} parent=5 // pred_check_branch
        %572 = sbr.rel (%p570) target = $region44
      $region43: #{tpu_custom_call.1} parent=5 // pred_region
        %s573 = ssub.s32 %s17, 2
        // Predicated region
        $region45: #{tpu_custom_call.1} parent=43 // pred_check
          %p574 = pneg %p98
        $region46: #{tpu_custom_call.1} parent=43 // pred_check_branch
          %576 = sbr.rel (%p574) target = $region48
        $region47: #{tpu_custom_call.1} parent=43 // pred_region
          %s577 = sand.u32 %s83, 1
          %s578 = scalar_lea.sflag [#allocation5], %s577
          %s579 = sand.u32 %s83, 1
          %s580 = smul.addr %s579, 8
          %s581 = scalar_lea.vmem [#allocation8], %s580
          %582 = dma.done %s578, 128
        $region48: #{tpu_custom_call.1} parent=43 // pred_fallthru
          _
      $region44: #{tpu_custom_call.1} parent=5 // pred_fallthru
        _
    $region6: #{tpu_custom_call.1} parent=1 // loop_footer
      %s21 = sadd.s32 1, %s17
    $region7: #{tpu_custom_call.1} parent=1 // loop_footer_branch
      %16 = sbr.rel target = $region3
    $region8: #{tpu_custom_call.1} parent=1 // loop_exit
      _
    %583 = vsyncpa [#allocation4], 1
    %s584 = scalar_lea.sflag [#allocation4], 1
    %585 = vsyncpa %s584, 1
    %586 = vsyncpa [#allocation7], 1
    %s587 = scalar_lea.sflag [#allocation7], 1
    %588 = vsyncpa %s587, 1
    %589 = vsyncpa [#allocation5], 1
    %s590 = scalar_lea.sflag [#allocation5], 1
    %591 = vsyncpa %s590, 1

</llo_original>
